<compile_context>
chip_gen: v5e
topology: v5e:2x2
jax: 0.10.0
libtpu: 0.0.40
codegen_flags: <defaults>
</compile_context>

<pallas_src>
import functools

import jax
import jax.numpy as jnp
import numpy as np
from jax.experimental import pallas as pl
from jax.experimental.pallas import tpu as pltpu


def _round_up(x, m):
    return (x + m - 1) // m * m


def _pick_tm(n_pad):
    # Prefer >=2 row blocks (gives the megacore "parallel" axis real work on v7x)
    # while keeping MXU-friendly >=128 tiles.
    for t in (512, 256, 128):
        if n_pad % t == 0 and n_pad // t >= 2:
            return t
    return min(n_pad, 512)


def _pick_tk(n_pad, max_tk):
    for t in (1024, 512, 256, 128):
        if t <= max_tk and n_pad % t == 0:
            return t
    return 128


# ----------------------------------------------------------------------------
# Kernel bodies
# ----------------------------------------------------------------------------
def _epilogue(acc, dis, w_ref, p_ref, cout):
    """Row D^{-1/2} scale, project (bf16 MXU), +bias, LayerNorm over real cout, ReLU."""
    acc = acc * dis                                             # left D^{-1/2}, exact f32
    h = jnp.dot(acc.astype(jnp.bfloat16), w_ref[...],
                preferred_element_type=jnp.float32) + p_ref[0:1, :]
    inv_cout = 1.0 / cout
    # Pad columns of h are exactly zero (W pad cols / bias pads are zero), so the
    # unmasked sums over cout_pad equal sums over the real cout features.
    mean = jnp.sum(h, axis=-1, keepdims=True) * inv_cout
    var = jnp.sum(h * h, axis=-1, keepdims=True) * inv_cout - mean * mean
    h_norm = (h - mean) * jax.lax.rsqrt(var + 1e-5)
    # gamma/beta pads are zero -> pad output columns are zero after ReLU.
    return jnp.maximum(h_norm * p_ref[1:2, :] + p_ref[2:3, :], 0.0)


def _gcn_kernel_single(a_ref, x_ref, dis_ref, w_ref, p_ref, o_ref, *, cout):
    # a_ref:   [tm, n_pad]        bf16 raw adjacency (0/1 + self loops) row slab
    # x_ref:   [n_pad, cin_pad]   bf16 features, already scaled by deg^{-1/2} rows
    # dis_ref: [tm, 1]            f32 deg^{-1/2} for this row tile
    # w_ref:   [cin_pad, cout_pad] bf16 GCN weight (zero padded)
    # p_ref:   [8, cout_pad]      f32 packed params: row0=bias, row1=gamma, row2=beta
    acc = jnp.dot(a_ref[...], x_ref[...], preferred_element_type=jnp.float32)
    out = _epilogue(acc, dis_ref[...], w_ref, p_ref, cout)
    # TODO(synk): nn.Dropout is identity in eval mode; training-mode masking
    # (pltpu.prng_random_bits) intentionally not applied here.
    o_ref[...] = out.astype(o_ref.dtype)


def _gcn_kernel_multi(a_ref, x_ref, dis_ref, w_ref, p_ref, o_ref, acc_ref, *, cout):
    # Large-graph path: 2-D grid (rows parallel, A-column reduction arbitrary),
    # f32 VMEM accumulator persists across k.
    k = pl.program_id(1)

    @pl.when(k == 0)
    def _():
        acc_ref[...] = jnp.zeros_like(acc_ref)

    acc_ref[...] += jnp.dot(a_ref[...], x_ref[...],
                            preferred_element_type=jnp.float32)

    @pl.when(k == pl.num_programs(1) - 1)
    def _():
        out = _epilogue(acc_ref[...], dis_ref[...], w_ref, p_ref, cout)
        o_ref[...] = out.astype(o_ref.dtype)


# ----------------------------------------------------------------------------
# One-time host-side graph constants (static EEG montage)
# ----------------------------------------------------------------------------
def build_graph_constants(edge_index, n):
    """Build padded adjacency (+ self loops) and deg^{-1/2} once, on the host.

    Returns:
      a_p   [n_pad, n_pad] bf16 : raw adjacency counts (small integers, exact in bf16)
      dis_p [n_pad, 1]     f32  : deg^{-1/2} (in-degree incl. self loop), zero padded
    """
    ei = np.asarray(edge_index)
    src = np.concatenate([ei[0], np.arange(n)])
    dst = np.concatenate([ei[1], np.arange(n)])
    adj = np.zeros((n, n), np.float32)
    np.add.at(adj, (dst, src), 1.0)
    deg = adj.sum(axis=1)
    dis = np.where(deg > 0, 1.0 / np.sqrt(deg), 0.0).astype(np.float32)

    n_pad = _round_up(n, 128)
    a_p = np.zeros((n_pad, n_pad), np.float32)
    a_p[:n, :n] = adj
    dis_p = np.zeros((n_pad, 1), np.float32)
    dis_p[:n, 0] = dis
    # TODO(synk): for very large graphs on v5e/v6e, an int8 adjacency + int8 X path
    # (f32 accumulation) would halve the dominant HBM stream; not applicable on v7x.
    return jnp.asarray(a_p, dtype=jnp.bfloat16), jnp.asarray(dis_p)


# ----------------------------------------------------------------------------
# Forward wrapper (jitted): tiny pad/scale passes + pallas_call
# ----------------------------------------------------------------------------
@functools.partial(jax.jit, static_argnames=("max_tk",))
def eeg_gcn_layer(x, a_p, dis_p, w, b, gamma, beta, max_tk=1024):
    """EEGGCNLayer forward (eval mode).

    x: [N, Cin] f32; a_p/dis_p: from build_graph_constants; w: [Cin, Cout];
    b/gamma/beta: [Cout].
    """
    n, cin = x.shape
    cout = w.shape[1]
    n_pad = a_p.shape[0]
    cin_pad = _round_up(cin, 128)
    cout_pad = _round_up(cout, 128)

    # Right normalization: A D^{-1/2} X == A (D^{-1/2} X).  Tiny N x Cin pass.
    x_p = jnp.zeros((n_pad, cin_pad), jnp.float32).at[:n, :cin].set(
        x.astype(jnp.float32))
    x_p = (x_p * dis_p).astype(jnp.bfloat16)

    w_p = jnp.zeros((cin_pad, cout_pad), jnp.bfloat16).at[:cin, :cout].set(
        w.astype(jnp.bfloat16))
    params = (jnp.zeros((8, cout_pad), jnp.float32)
              .at[0, :cout].set(b.astype(jnp.float32))
              .at[1, :cout].set(gamma.astype(jnp.float32))
              .at[2, :cout].set(beta.astype(jnp.float32)))

    tm = _pick_tm(n_pad)
    out_shape = jax.ShapeDtypeStruct((n_pad, cout_pad), jnp.float32)
    # TODO(synk): emit bf16 output instead if the downstream layer accepts it
    # (halves the writeback DMA and eases the single vst slot on v5e).

    if n_pad <= max_tk:
        # Common case (real EEG sizes): single pass, no k axis / accumulator / pl.when.
        grid_spec = pltpu.PrefetchScalarGridSpec(
            num_scalar_prefetch=0,
            grid=(n_pad // tm,),
            in_specs=[
                pl.BlockSpec((tm, n_pad), lambda i: (i, 0)),           # A row slab
                pl.BlockSpec((n_pad, cin_pad), lambda i: (0, 0)),      # X (scaled)
                pl.BlockSpec((tm, 1), lambda i: (i, 0)),               # deg^{-1/2}
                pl.BlockSpec((cin_pad, cout_pad), lambda i: (0, 0)),   # W
                pl.BlockSpec((8, cout_pad), lambda i: (0, 0)),         # b/gamma/beta
            ],
            out_specs=pl.BlockSpec((tm, cout_pad), lambda i: (i, 0)),
        )
        kernel = functools.partial(_gcn_kernel_single, cout=cout)
        dim_sem = ("parallel",)
    else:
        tk = _pick_tk(n_pad, max_tk)
        grid_spec = pltpu.PrefetchScalarGridSpec(
            num_scalar_prefetch=0,
            grid=(n_pad // tm, n_pad // tk),
            in_specs=[
                pl.BlockSpec((tm, tk), lambda i, k: (i, k)),              # A tile
                pl.BlockSpec((tk, cin_pad), lambda i, k: (k, 0)),         # X tile
                pl.BlockSpec((tm, 1), lambda i, k: (i, 0)),               # deg^{-1/2}
                pl.BlockSpec((cin_pad, cout_pad), lambda i, k: (0, 0)),   # W
                pl.BlockSpec((8, cout_pad), lambda i, k: (0, 0)),         # params
            ],
            out_specs=pl.BlockSpec((tm, cout_pad), lambda i, k: (i, 0)),
            scratch_shapes=[pltpu.VMEM((tm, cin_pad), jnp.float32)],
        )
        kernel = functools.partial(_gcn_kernel_multi, cout=cout)
        dim_sem = ("parallel", "arbitrary")

    out = pl.pallas_call(
        kernel,
        out_shape=out_shape,
        grid_spec=grid_spec,
        compiler_params=pltpu.CompilerParams(
            dimension_semantics=dim_sem,
            vmem_limit_bytes=48 * 1024 * 1024,   # safe on v7x (64 MiB physical)
        ),
    )(a_p, x_p, dis_p, w_p, params)

    return out[:n, :cout]


# ----------------------------------------------------------------------------
# Pure-JAX f32 reference (same math) for a sanity check
# ----------------------------------------------------------------------------
def _reference(x, edge_index, w, b, gamma, beta):
    n = x.shape[0]
    src, dst = edge_index[0], edge_index[1]
    loop = jnp.arange(n, dtype=edge_index.dtype)
    src = jnp.concatenate([src, loop])
    dst = jnp.concatenate([dst, loop])
    adj = jnp.zeros((n, n), jnp.float32).at[dst, src].add(1.0)
    deg = jnp.sum(adj, axis=1)
    dis = jnp.where(deg > 0, jax.lax.rsqrt(deg), 0.0)
    a_hat = dis[:, None] * adj * dis[None, :]
    h = a_hat @ (x @ w) + b[None, :]
    mean = jnp.mean(h, axis=-1, keepdims=True)
    var = jnp.mean((h - mean) ** 2, axis=-1, keepdims=True)
    h = (h - mean) / jnp.sqrt(var + 1e-5) * gamma[None, :] + beta[None, :]
    return jnp.maximum(h, 0.0)


if __name__ == "__main__":
    key = jax.random.PRNGKey(0)
    k_x, k_w, k_x2, k_w2 = jax.random.split(key, 4)

    # ---- Test 1: realistic EEG size (single-pass kernel path) ----
    N, C_IN, C_OUT = 16, 8, 32
    x = jax.random.normal(k_x, (N, C_IN), dtype=jnp.float32)

    ring_src = np.arange(N)
    ring_dst = (np.arange(N) + 1) % N
    src = np.concatenate([ring_src, ring_dst, [0, 3, 7]])
    dst = np.concatenate([ring_dst, ring_src, [8, 12, 2]])
    edge_index = jnp.asarray(np.stack([src, dst]), dtype=jnp.int32)  # [2, E]

    limit = float(np.sqrt(6.0 / (C_IN + C_OUT)))
    w = jax.random.uniform(k_w, (C_IN, C_OUT), jnp.float32, -limit, limit)
    b = jnp.zeros((C_OUT,), jnp.float32)
    gamma = jnp.ones((C_OUT,), jnp.float32)
    beta = jnp.zeros((C_OUT,), jnp.float32)

    a_p, dis_p = build_graph_constants(edge_index, N)   # one-time, hoisted
    out = jax.block_until_ready(eeg_gcn_layer(x, a_p, dis_p, w, b, gamma, beta))
    ref = jax.block_until_ready(_reference(x, edge_index, w, b, gamma, beta))
    np.testing.assert_allclose(np.asarray(out), np.asarray(ref), atol=3e-2, rtol=3e-2)

    # ---- Test 2: larger graph forced through the accumulating (2-D grid) path ----
    N2 = 200
    x2 = jax.random.normal(k_x2, (N2, C_IN), dtype=jnp.float32)
    rng = np.random.default_rng(0)
    src2 = rng.integers(0, N2, size=600)
    dst2 = rng.integers(0, N2, size=600)
    edge_index2 = jnp.asarray(np.stack([src2, dst2]), dtype=jnp.int32)
    w2 = jax.random.uniform(k_w2, (C_IN, C_OUT), jnp.float32, -limit, limit)
    b2 = 0.1 * jax.random.normal(jax.random.PRNGKey(1), (C_OUT,), jnp.float32)
    gamma2 = 1.0 + 0.1 * jax.random.normal(jax.random.PRNGKey(2), (C_OUT,), jnp.float32)
    beta2 = 0.1 * jax.random.normal(jax.random.PRNGKey(3), (C_OUT,), jnp.float32)

    a_p2, dis_p2 = build_graph_constants(edge_index2, N2)
    out2 = jax.block_until_ready(
        eeg_gcn_layer(x2, a_p2, dis_p2, w2, b2, gamma2, beta2, max_tk=128))
    ref2 = jax.block_until_ready(_reference(x2, edge_index2, w2, b2, gamma2, beta2))
    np.testing.assert_allclose(np.asarray(out2), np.asarray(ref2), atol=3e-2, rtol=3e-2)

    print("KERNEL_OK")
</pallas_src>

<mosaic_0001>
module attributes {stable_mosaic.version = 11 : i64} {
  func.func @_gcn_kernel_single(%arg0: i32, %arg1: memref<128x128xbf16, #tpu.memory_space<vmem>>, %arg2: memref<128x128xbf16, #tpu.memory_space<vmem>>, %arg3: memref<128x1xf32, #tpu.memory_space<vmem>>, %arg4: memref<128x128xbf16, #tpu.memory_space<vmem>>, %arg5: memref<8x128xf32, #tpu.memory_space<vmem>>, %arg6: memref<128x128xf32, #tpu.memory_space<vmem>>) attributes {dimension_semantics = [#tpu.dimension_semantics<parallel>], iteration_bounds = array<i64: 1>, scalar_prefetch = 0 : i64, scratch_operands = 0 : i64, tpu.core_type = #tpu.core_type<tc>, window_params = [{transform_indices = @transform_0, window_bounds = array<i64: 128, 128>}, {pipeline_mode = #tpu.pipeline_mode<synchronous>, transform_indices = @transform_1, window_bounds = array<i64: 128, 128>}, {transform_indices = @transform_2, window_bounds = array<i64: 128, 1>}, {pipeline_mode = #tpu.pipeline_mode<synchronous>, transform_indices = @transform_3, window_bounds = array<i64: 128, 128>}, {pipeline_mode = #tpu.pipeline_mode<synchronous>, transform_indices = @transform_4, window_bounds = array<i64: 8, 128>}, {transform_indices = @transform_5, window_bounds = array<i64: 128, 128>}]} {
    %c0 = arith.constant 0 : index
    %c0_0 = arith.constant 0 : index
    %0 = vector.load %arg1[%c0, %c0_0] : memref<128x128xbf16, #tpu.memory_space<vmem>>, vector<128x128xbf16>
    %c0_1 = arith.constant 0 : index
    %c0_2 = arith.constant 0 : index
    %1 = vector.load %arg2[%c0_1, %c0_2] : memref<128x128xbf16, #tpu.memory_space<vmem>>, vector<128x128xbf16>
    %cst = arith.constant dense<0.000000e+00> : vector<128x128xf32>
    %2 = tpu.matmul %0, %1, %cst {dimension_numbers = #tpu.dot_dimension_numbers<[1], [0], [0], [1], [0, 0, 1, 1], [], []>} : vector<128x128xbf16>, vector<128x128xbf16>, vector<128x128xf32> -> vector<128x128xf32>
    %c0_3 = arith.constant 0 : index
    %c0_4 = arith.constant 0 : index
    %3 = vector.load %arg3[%c0_3, %c0_4] : memref<128x1xf32, #tpu.memory_space<vmem>>, vector<128x1xf32>
    %4 = vector.broadcast %3 : vector<128x1xf32> to vector<128x128xf32>
    %5 = arith.mulf %2, %4 : vector<128x128xf32>
    %6 = arith.truncf %5 : vector<128x128xf32> to vector<128x128xbf16>
    %c0_5 = arith.constant 0 : index
    %c0_6 = arith.constant 0 : index
    %7 = vector.load %arg4[%c0_5, %c0_6] : memref<128x128xbf16, #tpu.memory_space<vmem>>, vector<128x128xbf16>
    %cst_7 = arith.constant dense<0.000000e+00> : vector<128x128xf32>
    %8 = tpu.matmul %6, %7, %cst_7 {dimension_numbers = #tpu.dot_dimension_numbers<[1], [0], [0], [1], [0, 0, 1, 1], [], []>} : vector<128x128xbf16>, vector<128x128xbf16>, vector<128x128xf32> -> vector<128x128xf32>
    %c0_8 = arith.constant 0 : index
    %c0_9 = arith.constant 0 : index
    %9 = vector.load %arg5[%c0_8, %c0_9] : memref<8x128xf32, #tpu.memory_space<vmem>>, vector<1x128xf32>
    %10 = vector.broadcast %9 : vector<1x128xf32> to vector<128x128xf32>
    %11 = arith.addf %8, %10 : vector<128x128xf32>
    %cst_10 = arith.constant dense<0.000000e+00> : vector<128xf32>
    %12 = vector.multi_reduction <add>, %11, %cst_10 [1] : vector<128x128xf32> to vector<128xf32>
    %13 = vector.shape_cast %12 : vector<128xf32> to vector<128x1xf32>
    %cst_11 = arith.constant 3.125000e-02 : f32
    %14 = vector.broadcast %cst_11 : f32 to vector<128x1xf32>
    %15 = arith.mulf %13, %14 : vector<128x1xf32>
    %16 = arith.mulf %11, %11 : vector<128x128xf32>
    %cst_12 = arith.constant dense<0.000000e+00> : vector<128xf32>
    %17 = vector.multi_reduction <add>, %16, %cst_12 [1] : vector<128x128xf32> to vector<128xf32>
    %18 = vector.shape_cast %17 : vector<128xf32> to vector<128x1xf32>
    %cst_13 = arith.constant 3.125000e-02 : f32
    %19 = vector.broadcast %cst_13 : f32 to vector<128x1xf32>
    %20 = arith.mulf %18, %19 : vector<128x1xf32>
    %21 = arith.mulf %15, %15 : vector<128x1xf32>
    %22 = arith.subf %20, %21 : vector<128x1xf32>
    %23 = vector.broadcast %15 : vector<128x1xf32> to vector<128x128xf32>
    %24 = arith.subf %11, %23 : vector<128x128xf32>
    %cst_14 = arith.constant 9.99999974E-6 : f32
    %25 = vector.broadcast %cst_14 : f32 to vector<128x1xf32>
    %26 = arith.addf %22, %25 : vector<128x1xf32>
    %27 = math.rsqrt %26 : vector<128x1xf32>
    %28 = vector.broadcast %27 : vector<128x1xf32> to vector<128x128xf32>
    %29 = arith.mulf %24, %28 : vector<128x128xf32>
    %c1 = arith.constant 1 : index
    %c0_15 = arith.constant 0 : index
    %30 = vector.load %arg5[%c1, %c0_15] : memref<8x128xf32, #tpu.memory_space<vmem>>, vector<1x128xf32>
    %31 = vector.broadcast %30 : vector<1x128xf32> to vector<128x128xf32>
    %32 = arith.mulf %29, %31 : vector<128x128xf32>
    %c2 = arith.constant 2 : index
    %c0_16 = arith.constant 0 : index
    %33 = vector.load %arg5[%c2, %c0_16] : memref<8x128xf32, #tpu.memory_space<vmem>>, vector<1x128xf32>
    %34 = vector.broadcast %33 : vector<1x128xf32> to vector<128x128xf32>
    %35 = arith.addf %32, %34 : vector<128x128xf32>
    %cst_17 = arith.constant 0.000000e+00 : f32
    %36 = vector.broadcast %cst_17 : f32 to vector<128x128xf32>
    %37 = arith.maximumf %35, %36 : vector<128x128xf32>
    %c0_18 = arith.constant 0 : index
    %c0_19 = arith.constant 0 : index
    %38 = vector.load %arg6[%c0_18, %c0_19] : memref<128x128xf32, #tpu.memory_space<vmem>>, vector<128x128xf32>
    tpu.vector_store %arg6[%c0_18, %c0_19], %37 {strides = array<i32>} : memref<128x128xf32, #tpu.memory_space<vmem>>, vector<128x128xf32>,
    return
  }
  func.func @transform_0(%arg0: i32) -> (i32, i32) {
    %c0_i32 = arith.constant 0 : i32
    %c0_i32_0 = arith.constant 0 : i32
    return %arg0, %c0_i32 : i32, i32
  }
  func.func @transform_1(%arg0: i32) -> (i32, i32) {
    %c0_i32 = arith.constant 0 : i32
    %c0_i32_0 = arith.constant 0 : i32
    %c0_i32_1 = arith.constant 0 : i32
    return %c0_i32, %c0_i32_0 : i32, i32
  }
  func.func @transform_2(%arg0: i32) -> (i32, i32) {
    %c0_i32 = arith.constant 0 : i32
    %c0_i32_0 = arith.constant 0 : i32
    return %arg0, %c0_i32 : i32, i32
  }
  func.func @transform_3(%arg0: i32) -> (i32, i32) {
    %c0_i32 = arith.constant 0 : i32
    %c0_i32_0 = arith.constant 0 : i32
    %c0_i32_1 = arith.constant 0 : i32
    return %c0_i32, %c0_i32_0 : i32, i32
  }
  func.func @transform_4(%arg0: i32) -> (i32, i32) {
    %c0_i32 = arith.constant 0 : i32
    %c0_i32_0 = arith.constant 0 : i32
    %c0_i32_1 = arith.constant 0 : i32
    return %c0_i32, %c0_i32_0 : i32, i32
  }
  func.func @transform_5(%arg0: i32) -> (i32, i32) {
    %c0_i32 = arith.constant 0 : i32
    %c0_i32_0 = arith.constant 0 : i32
    return %arg0, %c0_i32 : i32, i32
  }
}

</mosaic_0001>

<llo_original>
// kernel: eeg_gcn_layer.1
$region0: #{eeg_gcn_layer.1}
  #allocation0 [shape = 'u32[]', space=smem, size = 0x4, offset = 0x4, fixed_abs, tag = 'smem constant byte address 0x4 - core index']
  #allocation1 [shape = 'u32[72,128]{1,0:T(1,128)}', space=vmem, size = 0x9000, scoped, tag = 'internal scratch']
  %s0 = inlined_call_operand.vmem [shape: bf16[128,128], index: 0, kind: input, shape index: {}]
  %s1 = inlined_call_operand.vmem [shape: bf16[128,128], index: 1, kind: input, shape index: {}]
  %s2 = inlined_call_operand.vmem [shape: f32[128,1], index: 2, kind: input, shape index: {}]
  %s3 = inlined_call_operand.vmem [shape: bf16[128,128], index: 3, kind: input, shape index: {}]
  %s4 = inlined_call_operand.vmem [shape: f32[8,128], index: 4, kind: input, shape index: {}]
  %s5 = inlined_call_operand.vmem [shape: f32[128,128], index: 5, kind: output, shape index: {}]
  %s6 = sld [smem:[#allocation0]]
  $region30: #{eeg_gcn_layer.1} parent=0
    _
  %s8 = ssub.s32 1, %s6
  %s9 = scalar_select 0, %s8, %s6
  // Predicated region
  $region2: #{eeg_gcn_layer.1} parent=0 // pred_check
    _
  $region3: #{eeg_gcn_layer.1} parent=0 // pred_check_branch
    %11 = sbr.rel (0) target = $region5
  $region4: #{eeg_gcn_layer.1} parent=0 // pred_region
    _
  $region5: #{eeg_gcn_layer.1} parent=0 // pred_fallthru
    _
  // Predicated region
  $region6: #{eeg_gcn_layer.1} parent=0 // pred_check
    _
  $region7: #{eeg_gcn_layer.1} parent=0 // pred_check_branch
    %13 = sbr.rel (0) target = $region9
  $region8: #{eeg_gcn_layer.1} parent=0 // pred_region
    _
  $region9: #{eeg_gcn_layer.1} parent=0 // pred_fallthru
    _
  // Predicated region
  $region10: #{eeg_gcn_layer.1} parent=0 // pred_check
    _
  $region11: #{eeg_gcn_layer.1} parent=0 // pred_check_branch
    %15 = sbr.rel (0) target = $region13
  $region12: #{eeg_gcn_layer.1} parent=0 // pred_region
    _
  $region13: #{eeg_gcn_layer.1} parent=0 // pred_fallthru
    _
  // Predicated region
  $region14: #{eeg_gcn_layer.1} parent=0 // pred_check
    _
  $region15: #{eeg_gcn_layer.1} parent=0 // pred_check_branch
    %17 = sbr.rel (0) target = $region17
  $region16: #{eeg_gcn_layer.1} parent=0 // pred_region
    _
  $region17: #{eeg_gcn_layer.1} parent=0 // pred_fallthru
    _
  // Predicated region
  $region18: #{eeg_gcn_layer.1} parent=0 // pred_check
    _
  $region19: #{eeg_gcn_layer.1} parent=0 // pred_check_branch
    %19 = sbr.rel (0) target = $region21
  $region20: #{eeg_gcn_layer.1} parent=0 // pred_region
    _
  $region21: #{eeg_gcn_layer.1} parent=0 // pred_fallthru
    _
  %v20 = vld [vmem:[%s0] sm:$0xf]
  %v21 = vld [vmem:[%s0 + $0x4] sm:$0xf]
  %v22 = vld [vmem:[%s0 + $0x8] sm:$0xf]
  %v23 = vld [vmem:[%s0 + $0xc] sm:$0xf]
  %v24 = vld [vmem:[%s0 + $0x10] sm:$0xf]
  %v25 = vld [vmem:[%s0 + $0x14] sm:$0xf]
  %v26 = vld [vmem:[%s0 + $0x18] sm:$0xf]
  %v27 = vld [vmem:[%s0 + $0x1c] sm:$0xf]
  %v28 = vld [vmem:[%s0 + $0x20] sm:$0xf]
  %v29 = vld [vmem:[%s0 + $0x24] sm:$0xf]
  %v30 = vld [vmem:[%s0 + $0x28] sm:$0xf]
  %v31 = vld [vmem:[%s0 + $0x2c] sm:$0xf]
  %v32 = vld [vmem:[%s0 + $0x30] sm:$0xf]
  %v33 = vld [vmem:[%s0 + $0x34] sm:$0xf]
  %v34 = vld [vmem:[%s0 + $0x38] sm:$0xf]
  %v35 = vld [vmem:[%s0 + $0x3c] sm:$0xf]
  %v36 = vld [vmem:[%s1] sm:$0xf]
  %v37 = vld [vmem:[%s1 + $0x4] sm:$0xf]
  %v38 = vld [vmem:[%s1 + $0x8] sm:$0xf]
  %v39 = vld [vmem:[%s1 + $0xc] sm:$0xf]
  %v40 = vld [vmem:[%s1 + $0x10] sm:$0xf]
  %v41 = vld [vmem:[%s1 + $0x14] sm:$0xf]
  %v42 = vld [vmem:[%s1 + $0x18] sm:$0xf]
  %v43 = vld [vmem:[%s1 + $0x1c] sm:$0xf]
  %v44 = vld [vmem:[%s1 + $0x20] sm:$0xf]
  %v45 = vld [vmem:[%s1 + $0x24] sm:$0xf]
  %v46 = vld [vmem:[%s1 + $0x28] sm:$0xf]
  %v47 = vld [vmem:[%s1 + $0x2c] sm:$0xf]
  %v48 = vld [vmem:[%s1 + $0x30] sm:$0xf]
  %v49 = vld [vmem:[%s1 + $0x34] sm:$0xf]
  %v50 = vld [vmem:[%s1 + $0x38] sm:$0xf]
  %v51 = vld [vmem:[%s1 + $0x3c] sm:$0xf]
  %v68 = vunpack.c.l.b16 %v20
  %v69 = vunpack.c.l.b16 %v21
  %v70 = vunpack.c.l.b16 %v22
  %v71 = vunpack.c.l.b16 %v23
  %v72 = vunpack.c.l.b16 %v24
  %v73 = vunpack.c.l.b16 %v25
  %v74 = vunpack.c.l.b16 %v26
  %v75 = vunpack.c.l.b16 %v27
  %v76 = vunpack.c.l.b16 %v28
  %v77 = vunpack.c.l.b16 %v29
  %v78 = vunpack.c.l.b16 %v30
  %v79 = vunpack.c.l.b16 %v31
  %v80 = vunpack.c.l.b16 %v32
  %v81 = vunpack.c.l.b16 %v33
  %v82 = vunpack.c.l.b16 %v34
  %v83 = vunpack.c.l.b16 %v35
  %v84 = vpack.c.b16 %v69, %v68
  %v85 = vpack.c.b16 %v71, %v70
  %v86 = vpack.c.b16 %v73, %v72
  %v87 = vpack.c.b16 %v75, %v74
  %v88 = vpack.c.b16 %v77, %v76
  %v89 = vpack.c.b16 %v79, %v78
  %v90 = vpack.c.b16 %v81, %v80
  %v91 = vpack.c.b16 %v83, %v82
  %v116 = vunpack.c.l.b16 %v36
  %v117 = vunpack.c.l.b16 %v37
  %v118 = vunpack.c.l.b16 %v38
  %v119 = vunpack.c.l.b16 %v39
  %v120 = vunpack.c.l.b16 %v40
  %v121 = vunpack.c.l.b16 %v41
  %v122 = vunpack.c.l.b16 %v42
  %v123 = vunpack.c.l.b16 %v43
  %v124 = vunpack.c.l.b16 %v44
  %v125 = vunpack.c.l.b16 %v45
  %v126 = vunpack.c.l.b16 %v46
  %v127 = vunpack.c.l.b16 %v47
  %v128 = vunpack.c.l.b16 %v48
  %v129 = vunpack.c.l.b16 %v49
  %v130 = vunpack.c.l.b16 %v50
  %v131 = vunpack.c.l.b16 %v51
  %v132 = vpack.c.b16 %v117, %v116
  %v133 = vpack.c.b16 %v119, %v118
  %v134 = vpack.c.b16 %v121, %v120
  %v135 = vpack.c.b16 %v123, %v122
  %v136 = vpack.c.b16 %v125, %v124
  %v137 = vpack.c.b16 %v127, %v126
  %v138 = vpack.c.b16 %v129, %v128
  %v139 = vpack.c.b16 %v131, %v130
  %148 = vmatpush.bf16.msra.mxu0 %v139
  %149 = vmatpush.bf16.msra.mxu0 %v138
  %150 = vmatpush.bf16.msra.mxu0 %v137
  %151 = vmatpush.bf16.msra.mxu0 %v136
  %152 = vmatpush.bf16.msra.mxu0 %v135
  %153 = vmatpush.bf16.msra.mxu0 %v134
  %154 = vmatpush.bf16.msra.mxu0 %v133
  %155 = vmatpush.bf16.msra.mxu0 %v132
  %156 = vmatmul.bf16.gmra.mxu0 %v84
  %v157 = vpop.f32.mrf.mxu0
  %v158 = vadd.f32 0.0, %v157
  %v159 = vpop.f32.mrf.mxu0
  %v160 = vadd.f32 0.0, %v159
  %161 = vmatmul.bf16.gmra.mxu0 %v85
  %v162 = vpop.f32.mrf.mxu0
  %v163 = vadd.f32 0.0, %v162
  %v164 = vpop.f32.mrf.mxu0
  %v165 = vadd.f32 0.0, %v164
  %166 = vmatmul.bf16.gmra.mxu0 %v86
  %v167 = vpop.f32.mrf.mxu0
  %v168 = vadd.f32 0.0, %v167
  %v169 = vpop.f32.mrf.mxu0
  %v170 = vadd.f32 0.0, %v169
  %171 = vmatmul.bf16.gmra.mxu0 %v87
  %v172 = vpop.f32.mrf.mxu0
  %v173 = vadd.f32 0.0, %v172
  %v174 = vpop.f32.mrf.mxu0
  %v175 = vadd.f32 0.0, %v174
  %176 = vmatmul.bf16.gmra.mxu0 %v88
  %v177 = vpop.f32.mrf.mxu0
  %v178 = vadd.f32 0.0, %v177
  %v179 = vpop.f32.mrf.mxu0
  %v180 = vadd.f32 0.0, %v179
  %181 = vmatmul.bf16.gmra.mxu0 %v89
  %v182 = vpop.f32.mrf.mxu0
  %v183 = vadd.f32 0.0, %v182
  %v184 = vpop.f32.mrf.mxu0
  %v185 = vadd.f32 0.0, %v184
  %186 = vmatmul.bf16.gmra.mxu0 %v90
  %v187 = vpop.f32.mrf.mxu0
  %v188 = vadd.f32 0.0, %v187
  %v189 = vpop.f32.mrf.mxu0
  %v190 = vadd.f32 0.0, %v189
  %191 = vmatmul.bf16.gmra.mxu0 %v91
  %v192 = vpop.f32.mrf.mxu0
  %v193 = vadd.f32 0.0, %v192
  %v194 = vpop.f32.mrf.mxu0
  %v195 = vadd.f32 0.0, %v194
  %196 = vdwg.mxu0
  %v197 = vld [vmem:[%s2] sm:$0xff]
  %v198 = vld [vmem:[%s2 + $0x8] sm:$0xff]
  %v199 = vld [vmem:[%s2 + $0x10] sm:$0xff]
  %v200 = vld [vmem:[%s2 + $0x18] sm:$0xff]
  %v201 = vld [vmem:[%s2 + $0x20] sm:$0xff]
  %v202 = vld [vmem:[%s2 + $0x28] sm:$0xff]
  %v203 = vld [vmem:[%s2 + $0x30] sm:$0xff]
  %v204 = vld [vmem:[%s2 + $0x38] sm:$0xff]
  %v205 = vld [vmem:[%s2 + $0x40] sm:$0xff]
  %v206 = vld [vmem:[%s2 + $0x48] sm:$0xff]
  %v207 = vld [vmem:[%s2 + $0x50] sm:$0xff]
  %v208 = vld [vmem:[%s2 + $0x58] sm:$0xff]
  %v209 = vld [vmem:[%s2 + $0x60] sm:$0xff]
  %v210 = vld [vmem:[%s2 + $0x68] sm:$0xff]
  %v211 = vld [vmem:[%s2 + $0x70] sm:$0xff]
  %v212 = vld [vmem:[%s2 + $0x78] sm:$0xff]
  %214 = vset.pattern.permute.xlu0 0
  %215 = vperm.xlu0 %214, %v197
  %v216 = vpop.permute.xlu0 %215
  %219 = vset.pattern.permute.xlu0 0
  %220 = vperm.xlu0 %219, %v198
  %v221 = vpop.permute.xlu0 %220
  %224 = vset.pattern.permute.xlu0 0
  %225 = vperm.xlu0 %224, %v199
  %v226 = vpop.permute.xlu0 %225
  %229 = vset.pattern.permute.xlu0 0
  %230 = vperm.xlu0 %229, %v200
  %v231 = vpop.permute.xlu0 %230
  %234 = vset.pattern.permute.xlu0 0
  %235 = vperm.xlu0 %234, %v201
  %v236 = vpop.permute.xlu0 %235
  %239 = vset.pattern.permute.xlu0 0
  %240 = vperm.xlu0 %239, %v202
  %v241 = vpop.permute.xlu0 %240
  %244 = vset.pattern.permute.xlu0 0
  %245 = vperm.xlu0 %244, %v203
  %v246 = vpop.permute.xlu0 %245
  %249 = vset.pattern.permute.xlu0 0
  %250 = vperm.xlu0 %249, %v204
  %v251 = vpop.permute.xlu0 %250
  %254 = vset.pattern.permute.xlu0 0
  %255 = vperm.xlu0 %254, %v205
  %v256 = vpop.permute.xlu0 %255
  %259 = vset.pattern.permute.xlu0 0
  %260 = vperm.xlu0 %259, %v206
  %v261 = vpop.permute.xlu0 %260
  %264 = vset.pattern.permute.xlu0 0
  %265 = vperm.xlu0 %264, %v207
  %v266 = vpop.permute.xlu0 %265
  %269 = vset.pattern.permute.xlu0 0
  %270 = vperm.xlu0 %269, %v208
  %v271 = vpop.permute.xlu0 %270
  %274 = vset.pattern.permute.xlu0 0
  %275 = vperm.xlu0 %274, %v209
  %v276 = vpop.permute.xlu0 %275
  %279 = vset.pattern.permute.xlu0 0
  %280 = vperm.xlu0 %279, %v210
  %v281 = vpop.permute.xlu0 %280
  %284 = vset.pattern.permute.xlu0 0
  %285 = vperm.xlu0 %284, %v211
  %v286 = vpop.permute.xlu0 %285
  %289 = vset.pattern.permute.xlu0 0
  %290 = vperm.xlu0 %289, %v212
  %v291 = vpop.permute.xlu0 %290
  %v293 = vmul.f32 %v158, %v216
  %v294 = vmul.f32 %v160, %v221
  %v295 = vmul.f32 %v163, %v226
  %v296 = vmul.f32 %v165, %v231
  %v297 = vmul.f32 %v168, %v236
  %v298 = vmul.f32 %v170, %v241
  %v299 = vmul.f32 %v173, %v246
  %v300 = vmul.f32 %v175, %v251
  %v301 = vmul.f32 %v178, %v256
  %v302 = vmul.f32 %v180, %v261
  %v303 = vmul.f32 %v183, %v266
  %v304 = vmul.f32 %v185, %v271
  %v305 = vmul.f32 %v188, %v276
  %v306 = vmul.f32 %v190, %v281
  %v307 = vmul.f32 %v193, %v286
  %v308 = vmul.f32 %v195, %v291
  %v309 = vpack.c.bf16 %v294, %v293
  %v310 = vpack.c.bf16 %v296, %v295
  %v311 = vpack.c.bf16 %v298, %v297
  %v312 = vpack.c.bf16 %v300, %v299
  %v313 = vpack.c.bf16 %v302, %v301
  %v314 = vpack.c.bf16 %v304, %v303
  %v315 = vpack.c.bf16 %v306, %v305
  %v316 = vpack.c.bf16 %v308, %v307
  %v317 = vld [vmem:[%s3] sm:$0xf]
  %v318 = vld [vmem:[%s3 + $0x4] sm:$0xf]
  %v319 = vld [vmem:[%s3 + $0x8] sm:$0xf]
  %v320 = vld [vmem:[%s3 + $0xc] sm:$0xf]
  %v321 = vld [vmem:[%s3 + $0x10] sm:$0xf]
  %v322 = vld [vmem:[%s3 + $0x14] sm:$0xf]
  %v323 = vld [vmem:[%s3 + $0x18] sm:$0xf]
  %v324 = vld [vmem:[%s3 + $0x1c] sm:$0xf]
  %v325 = vld [vmem:[%s3 + $0x20] sm:$0xf]
  %v326 = vld [vmem:[%s3 + $0x24] sm:$0xf]
  %v327 = vld [vmem:[%s3 + $0x28] sm:$0xf]
  %v328 = vld [vmem:[%s3 + $0x2c] sm:$0xf]
  %v329 = vld [vmem:[%s3 + $0x30] sm:$0xf]
  %v330 = vld [vmem:[%s3 + $0x34] sm:$0xf]
  %v331 = vld [vmem:[%s3 + $0x38] sm:$0xf]
  %v332 = vld [vmem:[%s3 + $0x3c] sm:$0xf]
  %v333 = vld [vmem:[%s4] sm:$0x1]
  %v334 = vperm.slane %v333, 0
  %v351 = vunpack.c.l.b16 %v317
  %v352 = vunpack.c.l.b16 %v318
  %v353 = vunpack.c.l.b16 %v319
  %v354 = vunpack.c.l.b16 %v320
  %v355 = vunpack.c.l.b16 %v321
  %v356 = vunpack.c.l.b16 %v322
  %v357 = vunpack.c.l.b16 %v323
  %v358 = vunpack.c.l.b16 %v324
  %v359 = vunpack.c.l.b16 %v325
  %v360 = vunpack.c.l.b16 %v326
  %v361 = vunpack.c.l.b16 %v327
  %v362 = vunpack.c.l.b16 %v328
  %v363 = vunpack.c.l.b16 %v329
  %v364 = vunpack.c.l.b16 %v330
  %v365 = vunpack.c.l.b16 %v331
  %v366 = vunpack.c.l.b16 %v332
  %v367 = vpack.c.b16 %v352, %v351
  %v368 = vpack.c.b16 %v354, %v353
  %v369 = vpack.c.b16 %v356, %v355
  %v370 = vpack.c.b16 %v358, %v357
  %v371 = vpack.c.b16 %v360, %v359
  %v372 = vpack.c.b16 %v362, %v361
  %v373 = vpack.c.b16 %v364, %v363
  %v374 = vpack.c.b16 %v366, %v365
  %383 = vmatpush.bf16.msra.mxu0 %v374
  %384 = vmatpush.bf16.msra.mxu0 %v373
  %385 = vmatpush.bf16.msra.mxu0 %v372
  %386 = vmatpush.bf16.msra.mxu0 %v371
  %387 = vmatpush.bf16.msra.mxu0 %v370
  %388 = vmatpush.bf16.msra.mxu0 %v369
  %389 = vmatpush.bf16.msra.mxu0 %v368
  %390 = vmatpush.bf16.msra.mxu0 %v367
  %391 = vmatmul.bf16.gmra.mxu0 %v309
  %v392 = vpop.f32.mrf.mxu0
  %v393 = vadd.f32 %v334, %v392
  %v394 = vpop.f32.mrf.mxu0
  %v395 = vadd.f32 %v334, %v394
  %396 = vmatmul.bf16.gmra.mxu0 %v310
  %v397 = vpop.f32.mrf.mxu0
  %v398 = vadd.f32 %v334, %v397
  %v399 = vpop.f32.mrf.mxu0
  %v400 = vadd.f32 %v334, %v399
  %401 = vmatmul.bf16.gmra.mxu0 %v311
  %v402 = vpop.f32.mrf.mxu0
  %v403 = vadd.f32 %v334, %v402
  %v404 = vpop.f32.mrf.mxu0
  %v405 = vadd.f32 %v334, %v404
  %406 = vmatmul.bf16.gmra.mxu0 %v312
  %v407 = vpop.f32.mrf.mxu0
  %v408 = vadd.f32 %v334, %v407
  %v409 = vpop.f32.mrf.mxu0
  %v410 = vadd.f32 %v334, %v409
  %411 = vmatmul.bf16.gmra.mxu0 %v313
  %v412 = vpop.f32.mrf.mxu0
  %v413 = vadd.f32 %v334, %v412
  %v414 = vpop.f32.mrf.mxu0
  %v415 = vadd.f32 %v334, %v414
  %416 = vmatmul.bf16.gmra.mxu0 %v314
  %v417 = vpop.f32.mrf.mxu0
  %v418 = vadd.f32 %v334, %v417
  %v419 = vpop.f32.mrf.mxu0
  %v420 = vadd.f32 %v334, %v419
  %421 = vmatmul.bf16.gmra.mxu0 %v315
  %v422 = vpop.f32.mrf.mxu0
  %v423 = vadd.f32 %v334, %v422
  %v424 = vpop.f32.mrf.mxu0
  %v425 = vadd.f32 %v334, %v424
  %426 = vmatmul.bf16.gmra.mxu0 %v316
  %v427 = vpop.f32.mrf.mxu0
  %v428 = vadd.f32 %v334, %v427
  %v429 = vpop.f32.mrf.mxu0
  %v430 = vadd.f32 %v334, %v429
  %431 = vdwg.mxu0
  %432 = vadd.xlane.f32.xlu0 %v393
  %v433 = vpop.xlane.xlu0 %432
  %434 = vadd.xlane.f32.xlu0 %v395
  %v435 = vpop.xlane.xlu0 %434
  %436 = vadd.xlane.f32.xlu0 %v398
  %v437 = vpop.xlane.xlu0 %436
  %438 = vadd.xlane.f32.xlu0 %v400
  %v439 = vpop.xlane.xlu0 %438
  %440 = vadd.xlane.f32.xlu0 %v403
  %v441 = vpop.xlane.xlu0 %440
  %442 = vadd.xlane.f32.xlu0 %v405
  %v443 = vpop.xlane.xlu0 %442
  %444 = vadd.xlane.f32.xlu0 %v408
  %v445 = vpop.xlane.xlu0 %444
  %446 = vadd.xlane.f32.xlu0 %v410
  %v447 = vpop.xlane.xlu0 %446
  %448 = vadd.xlane.f32.xlu0 %v413
  %v449 = vpop.xlane.xlu0 %448
  %450 = vadd.xlane.f32.xlu0 %v415
  %v451 = vpop.xlane.xlu0 %450
  %452 = vadd.xlane.f32.xlu0 %v418
  %v453 = vpop.xlane.xlu0 %452
  %454 = vadd.xlane.f32.xlu0 %v420
  %v455 = vpop.xlane.xlu0 %454
  %456 = vadd.xlane.f32.xlu0 %v423
  %v457 = vpop.xlane.xlu0 %456
  %458 = vadd.xlane.f32.xlu0 %v425
  %v459 = vpop.xlane.xlu0 %458
  %460 = vadd.xlane.f32.xlu0 %v428
  %v461 = vpop.xlane.xlu0 %460
  %462 = vadd.xlane.f32.xlu0 %v430
  %v463 = vpop.xlane.xlu0 %462
  %v464 = vmul.f32 %v433, 0.03125
  %v465 = vmul.f32 %v435, 0.03125
  %v466 = vmul.f32 %v437, 0.03125
  %v467 = vmul.f32 %v439, 0.03125
  %v468 = vmul.f32 %v441, 0.03125
  %v469 = vmul.f32 %v443, 0.03125
  %v470 = vmul.f32 %v445, 0.03125
  %v471 = vmul.f32 %v447, 0.03125
  %v472 = vmul.f32 %v449, 0.03125
  %v473 = vmul.f32 %v451, 0.03125
  %v474 = vmul.f32 %v453, 0.03125
  %v475 = vmul.f32 %v455, 0.03125
  %v476 = vmul.f32 %v457, 0.03125
  %v477 = vmul.f32 %v459, 0.03125
  %v478 = vmul.f32 %v461, 0.03125
  %v479 = vmul.f32 %v463, 0.03125
  %v480 = vmul.f32 %v393, %v393
  %v481 = vmul.f32 %v395, %v395
  %v482 = vmul.f32 %v398, %v398
  %v483 = vmul.f32 %v400, %v400
  %v484 = vmul.f32 %v403, %v403
  %v485 = vmul.f32 %v405, %v405
  %v486 = vmul.f32 %v408, %v408
  %v487 = vmul.f32 %v410, %v410
  %v488 = vmul.f32 %v413, %v413
  %v489 = vmul.f32 %v415, %v415
  %v490 = vmul.f32 %v418, %v418
  %v491 = vmul.f32 %v420, %v420
  %v492 = vmul.f32 %v423, %v423
  %v493 = vmul.f32 %v425, %v425
  %v494 = vmul.f32 %v428, %v428
  %v495 = vmul.f32 %v430, %v430
  %496 = vadd.xlane.f32.xlu0 %v480
  %v497 = vpop.xlane.xlu0 %496
  %498 = vadd.xlane.f32.xlu0 %v481
  %v499 = vpop.xlane.xlu0 %498
  %500 = vadd.xlane.f32.xlu0 %v482
  %v501 = vpop.xlane.xlu0 %500
  %502 = vadd.xlane.f32.xlu0 %v483
  %v503 = vpop.xlane.xlu0 %502
  %504 = vadd.xlane.f32.xlu0 %v484
  %v505 = vpop.xlane.xlu0 %504
  %506 = vadd.xlane.f32.xlu0 %v485
  %v507 = vpop.xlane.xlu0 %506
  %508 = vadd.xlane.f32.xlu0 %v486
  %v509 = vpop.xlane.xlu0 %508
  %510 = vadd.xlane.f32.xlu0 %v487
  %v511 = vpop.xlane.xlu0 %510
  %512 = vadd.xlane.f32.xlu0 %v488
  %v513 = vpop.xlane.xlu0 %512
  %514 = vadd.xlane.f32.xlu0 %v489
  %v515 = vpop.xlane.xlu0 %514
  %516 = vadd.xlane.f32.xlu0 %v490
  %v517 = vpop.xlane.xlu0 %516
  %518 = vadd.xlane.f32.xlu0 %v491
  %v519 = vpop.xlane.xlu0 %518
  %520 = vadd.xlane.f32.xlu0 %v492
  %v521 = vpop.xlane.xlu0 %520
  %522 = vadd.xlane.f32.xlu0 %v493
  %v523 = vpop.xlane.xlu0 %522
  %524 = vadd.xlane.f32.xlu0 %v494
  %v525 = vpop.xlane.xlu0 %524
  %526 = vadd.xlane.f32.xlu0 %v495
  %v527 = vpop.xlane.xlu0 %526
  %v528 = vmul.f32 %v497, 0.03125
  %v529 = vmul.f32 %v499, 0.03125
  %v530 = vmul.f32 %v501, 0.03125
  %v531 = vmul.f32 %v503, 0.03125
  %v532 = vmul.f32 %v505, 0.03125
  %v533 = vmul.f32 %v507, 0.03125
  %v534 = vmul.f32 %v509, 0.03125
  %v535 = vmul.f32 %v511, 0.03125
  %v536 = vmul.f32 %v513, 0.03125
  %v537 = vmul.f32 %v515, 0.03125
  %v538 = vmul.f32 %v517, 0.03125
  %v539 = vmul.f32 %v519, 0.03125
  %v540 = vmul.f32 %v521, 0.03125
  %v541 = vmul.f32 %v523, 0.03125
  %v542 = vmul.f32 %v525, 0.03125
  %v543 = vmul.f32 %v527, 0.03125
  %v544 = vmul.f32 %v464, %v464
  %v545 = vmul.f32 %v465, %v465
  %v546 = vmul.f32 %v466, %v466
  %v547 = vmul.f32 %v467, %v467
  %v548 = vmul.f32 %v468, %v468
  %v549 = vmul.f32 %v469, %v469
  %v550 = vmul.f32 %v470, %v470
  %v551 = vmul.f32 %v471, %v471
  %v552 = vmul.f32 %v472, %v472
  %v553 = vmul.f32 %v473, %v473
  %v554 = vmul.f32 %v474, %v474
  %v555 = vmul.f32 %v475, %v475
  %v556 = vmul.f32 %v476, %v476
  %v557 = vmul.f32 %v477, %v477
  %v558 = vmul.f32 %v478, %v478
  %v559 = vmul.f32 %v479, %v479
  %v560 = vsub.f32 %v528, %v544
  %v561 = vsub.f32 %v529, %v545
  %v562 = vsub.f32 %v530, %v546
  %v563 = vsub.f32 %v531, %v547
  %v564 = vsub.f32 %v532, %v548
  %v565 = vsub.f32 %v533, %v549
  %v566 = vsub.f32 %v534, %v550
  %v567 = vsub.f32 %v535, %v551
  %v568 = vsub.f32 %v536, %v552
  %v569 = vsub.f32 %v537, %v553
  %v570 = vsub.f32 %v538, %v554
  %v571 = vsub.f32 %v539, %v555
  %v572 = vsub.f32 %v540, %v556
  %v573 = vsub.f32 %v541, %v557
  %v574 = vsub.f32 %v542, %v558
  %v575 = vsub.f32 %v543, %v559
  %v576 = vsub.f32 %v393, %v464
  %v577 = vsub.f32 %v395, %v465
  %v578 = vsub.f32 %v398, %v466
  %v579 = vsub.f32 %v400, %v467
  %v580 = vsub.f32 %v403, %v468
  %v581 = vsub.f32 %v405, %v469
  %v582 = vsub.f32 %v408, %v470
  %v583 = vsub.f32 %v410, %v471
  %v584 = vsub.f32 %v413, %v472
  %v585 = vsub.f32 %v415, %v473
  %v586 = vsub.f32 %v418, %v474
  %v587 = vsub.f32 %v420, %v475
  %v588 = vsub.f32 %v423, %v476
  %v589 = vsub.f32 %v425, %v477
  %v590 = vsub.f32 %v428, %v478
  %v591 = vsub.f32 %v430, %v479
  %v592 = vadd.f32 %v560, 1e-05
  %v593 = vadd.f32 %v561, 1e-05
  %v594 = vadd.f32 %v562, 1e-05
  %v595 = vadd.f32 %v563, 1e-05
  %v596 = vadd.f32 %v564, 1e-05
  %v597 = vadd.f32 %v565, 1e-05
  %v598 = vadd.f32 %v566, 1e-05
  %v599 = vadd.f32 %v567, 1e-05
  %v600 = vadd.f32 %v568, 1e-05
  %v601 = vadd.f32 %v569, 1e-05
  %v602 = vadd.f32 %v570, 1e-05
  %v603 = vadd.f32 %v571, 1e-05
  %v604 = vadd.f32 %v572, 1e-05
  %v605 = vadd.f32 %v573, 1e-05
  %v606 = vadd.f32 %v574, 1e-05
  %v607 = vadd.f32 %v575, 1e-05
  %v608 = vrsqrt.pop %v592
  %v609 = vmul.f32 %v608, %v592
  %v610 = vmul.f32 %v609, %v608
  %v611 = vmul.f32 0.5, %v610
  %v612 = vsub.f32 1.5, %v611
  %v613 = vmul.f32 %v608, %v612
  %vm614 = vweird.f32 %v592
  %vm615 = vweird.f32 %v608
  %vm616 = vmor %vm614, %vm615
  %v617 = vsel %vm616, %v608, %v613
  %v618 = vrsqrt.pop %v593
  %v619 = vmul.f32 %v618, %v593
  %v620 = vmul.f32 %v619, %v618
  %v621 = vmul.f32 0.5, %v620
  %v622 = vsub.f32 1.5, %v621
  %v623 = vmul.f32 %v618, %v622
  %vm624 = vweird.f32 %v593
  %vm625 = vweird.f32 %v618
  %vm626 = vmor %vm624, %vm625
  %v627 = vsel %vm626, %v618, %v623
  %v628 = vrsqrt.pop %v594
  %v629 = vmul.f32 %v628, %v594
  %v630 = vmul.f32 %v629, %v628
  %v631 = vmul.f32 0.5, %v630
  %v632 = vsub.f32 1.5, %v631
  %v633 = vmul.f32 %v628, %v632
  %vm634 = vweird.f32 %v594
  %vm635 = vweird.f32 %v628
  %vm636 = vmor %vm634, %vm635
  %v637 = vsel %vm636, %v628, %v633
  %v638 = vrsqrt.pop %v595
  %v639 = vmul.f32 %v638, %v595
  %v640 = vmul.f32 %v639, %v638
  %v641 = vmul.f32 0.5, %v640
  %v642 = vsub.f32 1.5, %v641
  %v643 = vmul.f32 %v638, %v642
  %vm644 = vweird.f32 %v595
  %vm645 = vweird.f32 %v638
  %vm646 = vmor %vm644, %vm645
  %v647 = vsel %vm646, %v638, %v643
  %v648 = vrsqrt.pop %v596
  %v649 = vmul.f32 %v648, %v596
  %v650 = vmul.f32 %v649, %v648
  %v651 = vmul.f32 0.5, %v650
  %v652 = vsub.f32 1.5, %v651
  %v653 = vmul.f32 %v648, %v652
  %vm654 = vweird.f32 %v596
  %vm655 = vweird.f32 %v648
  %vm656 = vmor %vm654, %vm655
  %v657 = vsel %vm656, %v648, %v653
  %v658 = vrsqrt.pop %v597
  %v659 = vmul.f32 %v658, %v597
  %v660 = vmul.f32 %v659, %v658
  %v661 = vmul.f32 0.5, %v660
  %v662 = vsub.f32 1.5, %v661
  %v663 = vmul.f32 %v658, %v662
  %vm664 = vweird.f32 %v597
  %vm665 = vweird.f32 %v658
  %vm666 = vmor %vm664, %vm665
  %v667 = vsel %vm666, %v658, %v663
  %v668 = vrsqrt.pop %v598
  %v669 = vmul.f32 %v668, %v598
  %v670 = vmul.f32 %v669, %v668
  %v671 = vmul.f32 0.5, %v670
  %v672 = vsub.f32 1.5, %v671
  %v673 = vmul.f32 %v668, %v672
  %vm674 = vweird.f32 %v598
  %vm675 = vweird.f32 %v668
  %vm676 = vmor %vm674, %vm675
  %v677 = vsel %vm676, %v668, %v673
  %v678 = vrsqrt.pop %v599
  %v679 = vmul.f32 %v678, %v599
  %v680 = vmul.f32 %v679, %v678
  %v681 = vmul.f32 0.5, %v680
  %v682 = vsub.f32 1.5, %v681
  %v683 = vmul.f32 %v678, %v682
  %vm684 = vweird.f32 %v599
  %vm685 = vweird.f32 %v678
  %vm686 = vmor %vm684, %vm685
  %v687 = vsel %vm686, %v678, %v683
  %v688 = vrsqrt.pop %v600
  %v689 = vmul.f32 %v688, %v600
  %v690 = vmul.f32 %v689, %v688
  %v691 = vmul.f32 0.5, %v690
  %v692 = vsub.f32 1.5, %v691
  %v693 = vmul.f32 %v688, %v692
  %vm694 = vweird.f32 %v600
  %vm695 = vweird.f32 %v688
  %vm696 = vmor %vm694, %vm695
  %v697 = vsel %vm696, %v688, %v693
  %v698 = vrsqrt.pop %v601
  %v699 = vmul.f32 %v698, %v601
  %v700 = vmul.f32 %v699, %v698
  %v701 = vmul.f32 0.5, %v700
  %v702 = vsub.f32 1.5, %v701
  %v703 = vmul.f32 %v698, %v702
  %vm704 = vweird.f32 %v601
  %vm705 = vweird.f32 %v698
  %vm706 = vmor %vm704, %vm705
  %v707 = vsel %vm706, %v698, %v703
  %v708 = vrsqrt.pop %v602
  %v709 = vmul.f32 %v708, %v602
  %v710 = vmul.f32 %v709, %v708
  %v711 = vmul.f32 0.5, %v710
  %v712 = vsub.f32 1.5, %v711
  %v713 = vmul.f32 %v708, %v712
  %vm714 = vweird.f32 %v602
  %vm715 = vweird.f32 %v708
  %vm716 = vmor %vm714, %vm715
  %v717 = vsel %vm716, %v708, %v713
  %v718 = vrsqrt.pop %v603
  %v719 = vmul.f32 %v718, %v603
  %v720 = vmul.f32 %v719, %v718
  %v721 = vmul.f32 0.5, %v720
  %v722 = vsub.f32 1.5, %v721
  %v723 = vmul.f32 %v718, %v722
  %vm724 = vweird.f32 %v603
  %vm725 = vweird.f32 %v718
  %vm726 = vmor %vm724, %vm725
  %v727 = vsel %vm726, %v718, %v723
  %v728 = vrsqrt.pop %v604
  %v729 = vmul.f32 %v728, %v604
  %v730 = vmul.f32 %v729, %v728
  %v731 = vmul.f32 0.5, %v730
  %v732 = vsub.f32 1.5, %v731
  %v733 = vmul.f32 %v728, %v732
  %vm734 = vweird.f32 %v604
  %vm735 = vweird.f32 %v728
  %vm736 = vmor %vm734, %vm735
  %v737 = vsel %vm736, %v728, %v733
  %v738 = vrsqrt.pop %v605
  %v739 = vmul.f32 %v738, %v605
  %v740 = vmul.f32 %v739, %v738
  %v741 = vmul.f32 0.5, %v740
  %v742 = vsub.f32 1.5, %v741
  %v743 = vmul.f32 %v738, %v742
  %vm744 = vweird.f32 %v605
  %vm745 = vweird.f32 %v738
  %vm746 = vmor %vm744, %vm745
  %v747 = vsel %vm746, %v738, %v743
  %v748 = vrsqrt.pop %v606
  %v749 = vmul.f32 %v748, %v606
  %v750 = vmul.f32 %v749, %v748
  %v751 = vmul.f32 0.5, %v750
  %v752 = vsub.f32 1.5, %v751
  %v753 = vmul.f32 %v748, %v752
  %vm754 = vweird.f32 %v606
  %vm755 = vweird.f32 %v748
  %vm756 = vmor %vm754, %vm755
  %v757 = vsel %vm756, %v748, %v753
  %v758 = vrsqrt.pop %v607
  %v759 = vmul.f32 %v758, %v607
  %v760 = vmul.f32 %v759, %v758
  %v761 = vmul.f32 0.5, %v760
  %v762 = vsub.f32 1.5, %v761
  %v763 = vmul.f32 %v758, %v762
  %vm764 = vweird.f32 %v607
  %vm765 = vweird.f32 %v758
  %vm766 = vmor %vm764, %vm765
  %v767 = vsel %vm766, %v758, %v763
  %v768 = vmul.f32 %v576, %v617
  %v769 = vmul.f32 %v577, %v627
  %v770 = vmul.f32 %v578, %v637
  %v771 = vmul.f32 %v579, %v647
  %v772 = vmul.f32 %v580, %v657
  %v773 = vmul.f32 %v581, %v667
  %v774 = vmul.f32 %v582, %v677
  %v775 = vmul.f32 %v583, %v687
  %v776 = vmul.f32 %v584, %v697
  %v777 = vmul.f32 %v585, %v707
  %v778 = vmul.f32 %v586, %v717
  %v779 = vmul.f32 %v587, %v727
  %v780 = vmul.f32 %v588, %v737
  %v781 = vmul.f32 %v589, %v747
  %v782 = vmul.f32 %v590, %v757
  %v783 = vmul.f32 %v591, %v767
  %v784 = vld [vmem:[%s4 + $0x1] sm:$0x1]
  %v785 = vperm.slane %v784, 0
  %v786 = vmul.f32 %v768, %v785
  %v787 = vmul.f32 %v769, %v785
  %v788 = vmul.f32 %v770, %v785
  %v789 = vmul.f32 %v771, %v785
  %v790 = vmul.f32 %v772, %v785
  %v791 = vmul.f32 %v773, %v785
  %v792 = vmul.f32 %v774, %v785
  %v793 = vmul.f32 %v775, %v785
  %v794 = vmul.f32 %v776, %v785
  %v795 = vmul.f32 %v777, %v785
  %v796 = vmul.f32 %v778, %v785
  %v797 = vmul.f32 %v779, %v785
  %v798 = vmul.f32 %v780, %v785
  %v799 = vmul.f32 %v781, %v785
  %v800 = vmul.f32 %v782, %v785
  %v801 = vmul.f32 %v783, %v785
  %v802 = vld [vmem:[%s4 + $0x2] sm:$0x1]
  %v803 = vperm.slane %v802, 0
  %v804 = vadd.f32 %v786, %v803
  %v805 = vadd.f32 %v787, %v803
  %v806 = vadd.f32 %v788, %v803
  %v807 = vadd.f32 %v789, %v803
  %v808 = vadd.f32 %v790, %v803
  %v809 = vadd.f32 %v791, %v803
  %v810 = vadd.f32 %v792, %v803
  %v811 = vadd.f32 %v793, %v803
  %v812 = vadd.f32 %v794, %v803
  %v813 = vadd.f32 %v795, %v803
  %v814 = vadd.f32 %v796, %v803
  %v815 = vadd.f32 %v797, %v803
  %v816 = vadd.f32 %v798, %v803
  %v817 = vadd.f32 %v799, %v803
  %v818 = vadd.f32 %v800, %v803
  %v819 = vadd.f32 %v801, %v803
  %v820 = vmax.f32 %v804, 0.0
  %v821 = vmax.f32 %v805, 0.0
  %v822 = vmax.f32 %v806, 0.0
  %v823 = vmax.f32 %v807, 0.0
  %v824 = vmax.f32 %v808, 0.0
  %v825 = vmax.f32 %v809, 0.0
  %v826 = vmax.f32 %v810, 0.0
  %v827 = vmax.f32 %v811, 0.0
  %v828 = vmax.f32 %v812, 0.0
  %v829 = vmax.f32 %v813, 0.0
  %v830 = vmax.f32 %v814, 0.0
  %v831 = vmax.f32 %v815, 0.0
  %v832 = vmax.f32 %v816, 0.0
  %v833 = vmax.f32 %v817, 0.0
  %v834 = vmax.f32 %v818, 0.0
  %v835 = vmax.f32 %v819, 0.0
  %836 = vst [vmem:[%s5] sm:$0xff] %v820
  %837 = vst [vmem:[%s5 + $0x8] sm:$0xff] %v821
  %838 = vst [vmem:[%s5 + $0x10] sm:$0xff] %v822
  %839 = vst [vmem:[%s5 + $0x18] sm:$0xff] %v823
  %840 = vst [vmem:[%s5 + $0x20] sm:$0xff] %v824
  %841 = vst [vmem:[%s5 + $0x28] sm:$0xff] %v825
  %842 = vst [vmem:[%s5 + $0x30] sm:$0xff] %v826
  %843 = vst [vmem:[%s5 + $0x38] sm:$0xff] %v827
  %844 = vst [vmem:[%s5 + $0x40] sm:$0xff] %v828
  %845 = vst [vmem:[%s5 + $0x48] sm:$0xff] %v829
  %846 = vst [vmem:[%s5 + $0x50] sm:$0xff] %v830
  %847 = vst [vmem:[%s5 + $0x58] sm:$0xff] %v831
  %848 = vst [vmem:[%s5 + $0x60] sm:$0xff] %v832
  %849 = vst [vmem:[%s5 + $0x68] sm:$0xff] %v833
  %850 = vst [vmem:[%s5 + $0x70] sm:$0xff] %v834
  %851 = vst [vmem:[%s5 + $0x78] sm:$0xff] %v835
  // Predicated region
  $region22: #{eeg_gcn_layer.1} parent=0 // pred_check
    _
  $region23: #{eeg_gcn_layer.1} parent=0 // pred_check_branch
    %853 = sbr.rel (0) target = $region25
  $region24: #{eeg_gcn_layer.1} parent=0 // pred_region
    _
  $region25: #{eeg_gcn_layer.1} parent=0 // pred_fallthru
    _
  // Predicated region
  $region26: #{eeg_gcn_layer.1} parent=0 // pred_check
    _
  $region27: #{eeg_gcn_layer.1} parent=0 // pred_check_branch
    %855 = sbr.rel (0) target = $region29
  $region28: #{eeg_gcn_layer.1} parent=0 // pred_region
    _
  $region29: #{eeg_gcn_layer.1} parent=0 // pred_fallthru
    _

</llo_original>
